<compile_context>
chip_gen: v7x
topology: tpu7x:2x2x1
jax: 0.10.0
libtpu: 0.0.40
codegen_flags: <defaults>
</compile_context>

<pallas_src>
import numpy as np
import jax
import jax.numpy as jnp
from jax import lax
from jax.experimental import pallas as pl
from jax.experimental.pallas import tpu as pltpu


def _build_index_map(in_shape):
    """Static replay of the torch layout ops on flat indices (NumPy, trace time).

    Returns (idx_flat, out_shape): idx_flat[j] is the flat INPUT element copied
    to flat output position j.
    """
    n = int(np.prod(in_shape))
    base = np.arange(n, dtype=np.int32).reshape(in_shape)
    a = np.concatenate([base, base], axis=0)               # torch.cat dim=0
    y = np.transpose(a, (2, 1, 0))                         # .transpose(0, 2)
    # TODO(synk): torch .view on this non-contiguous transpose would normally
    # error; we keep the reshape-of-copy (row-major) semantics of the accepted
    # JAX reference.
    y = y.reshape(y.shape[1], y.shape[0], -1)              # .view(3, 4, -1)
    y = np.concatenate([y, y], axis=1)                     # torch.cat dim=1
    idx = y.reshape(y.shape[0], -1)                        # .view(3, -1)
    return idx.reshape(-1).astype(np.int32), idx.shape


def _gather_tanh3_kernel(x_ref, idx_ref, o_ref):
    """x_ref: (N, 1) f32 unique input values (column).
       idx_ref: (1, L) int32, idx_ref[0, j] = input index feeding output lane j.
       o_ref: (1, L) f32 (L = lane-padded output width, multiple of 128).
    """
    n = x_ref.shape[0]
    l = idx_ref.shape[1]
    # One-hot-on-iota along sublanes: sel[k, j] = (idx[j] == k).
    k = lax.broadcasted_iota(jnp.int32, (n, l), 0)
    sel = idx_ref[...] == k                                  # (N, L) bool
    # True copy semantics: each output lane picks exactly one input value;
    # unselected rows contribute 0.0 (no NaN contamination).
    xv = jnp.broadcast_to(x_ref[...], (n, l))                # lane-broadcast column
    gathered = jnp.sum(jnp.where(sel, xv, 0.0), axis=0, keepdims=True)  # (1, L)
    # tanh^3 on a single lane-dense vreg row: 3 EUP pushes total.
    o_ref[...] = jnp.tanh(jnp.tanh(jnp.tanh(gathered)))


def model_forward(x):
    idx_np, out_shape = _build_index_map(x.shape)
    n = int(np.prod(x.shape))                 # 24 unique input elements
    m = idx_np.size                           # 96 output elements
    lanes = ((m + 127) // 128) * 128          # pad output row to full vregs (128)

    idx_pad = np.zeros((1, lanes), dtype=np.int32)
    idx_pad[0, :m] = idx_np                   # dummy lanes gather element 0 (discarded)

    x_col = x.reshape(n, 1)                   # contiguous (free) reshape
    idx_row = jnp.asarray(idx_pad)            # 512 B trace-time constant

    out_row = pl.pallas_call(
        _gather_tanh3_kernel,
        out_shape=jax.ShapeDtypeStruct((1, lanes), x.dtype),
        in_specs=[pl.BlockSpec(memory_space=pltpu.MemorySpace.VMEM),
                  pl.BlockSpec(memory_space=pltpu.MemorySpace.VMEM)],
        out_specs=pl.BlockSpec(memory_space=pltpu.MemorySpace.VMEM),
    )(x_col, idx_row)

    return out_row[0, :m].reshape(out_shape)  # slice padding, logical (3, 32)


if __name__ == "__main__":
    key = jax.random.PRNGKey(0)
    x = jax.random.normal(key, (2, 3, 4), dtype=jnp.float32)

    out = jax.jit(model_forward)(x)
    out = jax.block_until_ready(out)

    # Pure-JAX reference of the exact same semantics.
    ref = jnp.concatenate([x, x], axis=0)
    ref = jnp.tanh(jnp.transpose(ref, (2, 1, 0)))
    ref = jnp.tanh(ref.reshape(ref.shape[1], ref.shape[0], -1))
    ref = jnp.concatenate([ref, ref], axis=1)
    ref = jnp.tanh(ref.reshape(ref.shape[0], -1))

    assert out.shape == (3, 32), out.shape
    assert out.dtype == jnp.float32
    assert jnp.allclose(out, ref, atol=1e-6, rtol=1e-6)
    print("KERNEL_OK")
</pallas_src>

<mosaic_0001>
module attributes {stable_mosaic.version = 11 : i64} {
  func.func @_gather_tanh3_kernel(%arg0: memref<24x1xf32, #tpu.memory_space<vmem>>, %arg1: memref<1x128xi32, #tpu.memory_space<vmem>>, %arg2: memref<1x128xf32, #tpu.memory_space<vmem>>) attributes {dimension_semantics = [], scalar_prefetch = 0 : i64, scratch_operands = 0 : i64, tpu.core_type = #tpu.core_type<tc>} {
    %0 = tpu.iota {dimensions = array<i32: 0>} : vector<24x128xi32>
    %c0 = arith.constant 0 : index
    %c0_0 = arith.constant 0 : index
    %1 = vector.load %arg1[%c0, %c0_0] : memref<1x128xi32, #tpu.memory_space<vmem>>, vector<1x128xi32>
    %2 = vector.broadcast %1 : vector<1x128xi32> to vector<24x128xi32>
    %3 = arith.cmpi eq, %2, %0 : vector<24x128xi32>
    %c0_1 = arith.constant 0 : index
    %c0_2 = arith.constant 0 : index
    %4 = vector.load %arg0[%c0_1, %c0_2] : memref<24x1xf32, #tpu.memory_space<vmem>>, vector<24x1xf32>
    %5 = vector.shape_cast %4 : vector<24x1xf32> to vector<24x1xf32>
    %6 = vector.broadcast %5 : vector<24x1xf32> to vector<24x128xf32>
    %cst = arith.constant 0.000000e+00 : f32
    %7 = vector.broadcast %cst : f32 to vector<24x128xf32>
    %8 = arith.select %3, %6, %7 : vector<24x128xi1>, vector<24x128xf32>
    %cst_3 = arith.constant dense<0.000000e+00> : vector<128xf32>
    %9 = vector.multi_reduction <add>, %8, %cst_3 [0] : vector<24x128xf32> to vector<128xf32>
    %10 = vector.shape_cast %9 : vector<128xf32> to vector<1x128xf32>
    %11 = math.tanh %10 : vector<1x128xf32>
    %12 = math.tanh %11 : vector<1x128xf32>
    %13 = math.tanh %12 : vector<1x128xf32>
    %c0_4 = arith.constant 0 : index
    %c0_5 = arith.constant 0 : index
    %14 = vector.load %arg2[%c0_4, %c0_5] : memref<1x128xf32, #tpu.memory_space<vmem>>, vector<1x128xf32>
    tpu.vector_store %arg2[%c0_4, %c0_5], %13 {strides = array<i32>} : memref<1x128xf32, #tpu.memory_space<vmem>>, vector<1x128xf32>,
    return
  }
}

</mosaic_0001>

<llo_original>
// kernel: squeeze.1
$region0: #{squeeze.1}
  %s0 = inlined_call_operand.vmem [shape: f32[96], index: 0, kind: input, shape index: {}]
  %s1 = inlined_call_operand.hbm [shape: f32[3,32], index: 1, kind: output, shape index: {}]
  $region1: #{squeeze.1} parent=0
    #allocation0 [shape = 'u8[2048]{0}', space=vmem, size = 0x800, scoped, tag = 'operand span for operand 1']
    #allocation1 [shape = 's32[1]{0}', space=sflag, size = 0x4, scoped, tag = 'scoped memory for squeeze.1']
    #allocation2 [shape = 'u8[4096]{0}', space=vmem, size = 0x1000, scoped, tag = 'scoped mem for output reshape']
    #allocation3 [shape = 'u8[4096]{0}', space=vmem, size = 0x1000, scoped, tag = 'scoped mem for input reshape']
    %2 = vsyncpa [#allocation1], 0
    %s4 = sshllo.u32 0, 1
    %v5 = vld [vmem:[%s0] sm:%s4]
    %6 = vst [vmem:[#allocation3] sm:%s4] %v5
    %v7 = vld [vmem:[#allocation3] sm:$0x1]
    %vm8 = vcmask 261120
    %9 = vst.msk [vmem:[#allocation2] sm:$0x1] %vm8, %v7
    %v10 = vld [vmem:[#allocation3] sm:$0x1]
    %11 = vrot.lane.b32.xlu0 %v10, 96
    %v12 = vpop.permute.xlu0 %11
    %vm13 = vcmask 261120
    %s14 = scalar_lea.vmem [#allocation2], 1
    %15 = vst.msk [vmem:[%s14] sm:$0x1] %vm13, %v12
    %v16 = vld [vmem:[#allocation3] sm:$0x1]
    %17 = vrot.lane.b32.xlu0 %v16, 64
    %v18 = vpop.permute.xlu0 %17
    %vm19 = vcmask 261120
    %s20 = scalar_lea.vmem [#allocation2], 2
    %21 = vst.msk [vmem:[%s20] sm:$0x1] %vm19, %v18
    %s23 = sshllo.u32 0, 4
    %v25 = vld [vmem:[#allocation2] sm:%s23]
    %s26 = sshllo.u32 0, 4
    %27 = vst [vmem:[#allocation0] sm:%s26] %v25
    %s29 = ssub.s32 64, 64
    %30 = vsyncadd [#allocation1], %s29
    %s32 = sshll.u32 [#allocation0], 4
    %s33 = int_to_ptr.vmem [resolvable:$true] %s32
    %35 = dma.vmem_to_hbm [thread:$0]  %s33, 64, %s1, [#allocation1]
    %36 = dma.done [#allocation1], 64
    %37 = vsyncpa [#allocation1], 1

// kernel: model_forward.1
$region0: #{model_forward.1}
  #allocation0 [shape = 'u32[]', space=smem, size = 0x4, offset = 0x4, fixed_abs, tag = 'smem constant byte address 0x4 - core index']
  #allocation1 [shape = 'u32[144,128]{1,0:T(1,128)}', space=vmem, size = 0x12000, scoped, tag = 'internal scratch']
  %s0 = inlined_call_operand.vmem [shape: f32[24,1], index: 0, kind: input, shape index: {}]
  %s1 = inlined_call_operand.vmem [shape: s32[1,128], index: 1, kind: input, shape index: {}]
  %s2 = inlined_call_operand.vmem [shape: f32[1,128], index: 2, kind: output, shape index: {}]
  %s3 = sld [smem:[#allocation0]]
  $region18: #{model_forward.1} parent=0
    _
  %s5 = ssub.s32 1, %s3
  %s6 = scalar_select 0, %s5, %s3
  // Predicated region
  $region2: #{model_forward.1} parent=0 // pred_check
    _
  $region3: #{model_forward.1} parent=0 // pred_check_branch
    %8 = sbr.rel (0) target = $region5
  $region4: #{model_forward.1} parent=0 // pred_region
    _
  $region5: #{model_forward.1} parent=0 // pred_fallthru
    _
  // Predicated region
  $region6: #{model_forward.1} parent=0 // pred_check
    _
  $region7: #{model_forward.1} parent=0 // pred_check_branch
    %10 = sbr.rel (0) target = $region9
  $region8: #{model_forward.1} parent=0 // pred_region
    _
  $region9: #{model_forward.1} parent=0 // pred_fallthru
    _
  %v11 = vlaneseq
  %v12 = vshrl.u32 %v11, 7
  %v13 = vadd.s32 %v12, 8
  %v14 = vadd.s32 %v12, 16
  %v15 = vld [vmem:[%s1] sm:$0x1]
  %v16 = vlaneseq
  %v17 = vshrl.u32 %v16, 7
  %v18 = vsub.s32 0, %v17
  %v19 = vrot.slane %v15, %v18
  %vm20 = vcmp.eq.s32.totalorder %v19, %v12
  %vm21 = vcmp.eq.s32.totalorder %v19, %v13
  %vm22 = vcmp.eq.s32.totalorder %v19, %v14
  %v23 = vld [vmem:[%s0] sm:$0xff]
  %v24 = vld [vmem:[%s0 + $0x8] sm:$0xff]
  %v25 = vld [vmem:[%s0 + $0x10] sm:$0xff]
  %27 = vset.pattern.permute.xlu0 0
  %28 = vperm.xlu0 %27, %v23
  %v29 = vpop.permute.xlu0 %28
  %32 = vset.pattern.permute.xlu0 0
  %33 = vperm.xlu0 %32, %v24
  %v34 = vpop.permute.xlu0 %33
  %37 = vset.pattern.permute.xlu0 0
  %38 = vperm.xlu0 %37, %v25
  %v39 = vpop.permute.xlu0 %38
  %v41 = vsel %vm20, %v29, 0.0
  %v42 = vsel %vm21, %v34, 0.0
  %v43 = vsel %vm22, %v39, 0.0
  %v44 = vadd.f32 %v41, %v42
  %v45 = vadd.f32 %v44, %v43
  %v46 = vrot.slane %v45, 4
  %v47 = vadd.f32 %v45, %v46
  %v48 = vrot.slane %v47, 2
  %v49 = vadd.f32 %v47, %v48
  %v50 = vrot.slane %v49, 1
  %v51 = vadd.f32 %v49, %v50
  %v52 = vtanh.pop %v51
  %v53 = vtanh.pop %v52
  %v54 = vtanh.pop %v53
  %55 = vst [vmem:[%s2] sm:$0x1] %v54
  // Predicated region
  $region10: #{model_forward.1} parent=0 // pred_check
    _
  $region11: #{model_forward.1} parent=0 // pred_check_branch
    %57 = sbr.rel (0) target = $region13
  $region12: #{model_forward.1} parent=0 // pred_region
    _
  $region13: #{model_forward.1} parent=0 // pred_fallthru
    _
  // Predicated region
  $region14: #{model_forward.1} parent=0 // pred_check
    _
  $region15: #{model_forward.1} parent=0 // pred_check_branch
    %59 = sbr.rel (0) target = $region17
  $region16: #{model_forward.1} parent=0 // pred_region
    _
  $region17: #{model_forward.1} parent=0 // pred_fallthru
    _

</llo_original>
